<compile_context>
chip_gen: v5e
topology: v5e:2x2
jax: 0.10.0
libtpu: 0.0.40
codegen_flags: <defaults>
</compile_context>

<pallas_src>
import jax
import jax.numpy as jnp
from jax import lax
from jax.experimental import pallas as pl
from jax.experimental.pallas import tpu as pltpu

LEAKY_SLOPE = 0.01   # nn.LeakyReLU default
LN_EPS = 1e-5        # nn.LayerNorm default
VMEM_LIMIT = 32 * 1024 * 1024


def _round_up(x, m):
    return ((x + m - 1) // m) * m


def _layernorm(x, gamma, beta):
    mu = jnp.mean(x, axis=-1, keepdims=True)
    xc = x - mu
    var = jnp.mean(xc * xc, axis=-1, keepdims=True)
    return xc * lax.rsqrt(var + LN_EPS) * gamma + beta


def _gelu_exact(x):
    # nn.GELU() default = exact erf formulation.
    return 0.5 * x * (1.0 + lax.erf(x * (1.0 / jnp.sqrt(2.0).astype(x.dtype))))


# ---------------------------------------------------------------------------
# Phase 1: span-feature gather via selector matmul (one batch row per step).
# Output rows: 0:first_A 1:last_A 2:mean_A 3:first_B 4:last_B 5:mean_B 6:pron 7:0
# Precondition (same as the PyTorch reference): end > start for both spans.
# ---------------------------------------------------------------------------
def _gather_kernel(off_ref, emb_ref, g_ref):
    b = pl.program_id(0)
    start_a = off_ref[b, 0]
    end_a = off_ref[b, 1]
    start_b = off_ref[b, 2]
    end_b = off_ref[b, 3]
    pron = off_ref[b, 4]

    S = emb_ref.shape[0]
    row = lax.broadcasted_iota(jnp.int32, (8, S), 0)
    col = lax.broadcasted_iota(jnp.int32, (8, S), 1)

    inv_a = 1.0 / (end_a - start_a).astype(jnp.float32)
    inv_b = 1.0 / (end_b - start_b).astype(jnp.float32)

    sel = jnp.zeros((8, S), jnp.float32)
    sel = jnp.where((row == 0) & (col == start_a), 1.0, sel)
    sel = jnp.where((row == 1) & (col == end_a - 1), 1.0, sel)
    sel = jnp.where((row == 2) & (col >= start_a) & (col < end_a), inv_a, sel)
    sel = jnp.where((row == 3) & (col == start_b), 1.0, sel)
    sel = jnp.where((row == 4) & (col == end_b - 1), 1.0, sel)
    sel = jnp.where((row == 5) & (col >= start_b) & (col < end_b), inv_b, sel)
    sel = jnp.where((row == 6) & (col == pron), 1.0, sel)

    g_ref[...] = jnp.dot(sel, emb_ref[...], preferred_element_type=jnp.float32)


# ---------------------------------------------------------------------------
# Phase 2: batched MLP head.  All matmuls have M = TB rows.
# ---------------------------------------------------------------------------
def _mlp_kernel(pron_ref, ent_ref,
                w1p_ref, b1p_ref, gp_ref, bp_ref, w2p_ref, b2p_ref,
                w1e_ref, b1e_ref, ge_ref, be_ref, w2e_ref, b2e_ref,
                wlp_ref, wle_ref, bl_ref, wc_ref, bc_ref,
                out_ref):
    cdt = w1p_ref.dtype                      # matmul input dtype (f32 or bf16)
    pron = pron_ref[...].astype(cdt)         # (TB, H)
    ent = ent_ref[...].astype(cdt)           # (TB, 6H)

    # ffnn_pronoun: Linear(H,H) -> LayerNorm -> LeakyReLU -> Linear(H,HH)
    hp = jnp.dot(pron, w1p_ref[...], preferred_element_type=jnp.float32) + b1p_ref[...]
    hp = _layernorm(hp, gp_ref[...], bp_ref[...])
    hp = jnp.where(hp > 0, hp, LEAKY_SLOPE * hp)
    xp = jnp.dot(hp.astype(cdt), w2p_ref[...], preferred_element_type=jnp.float32) + b2p_ref[...]

    # ffnn_entities: Linear(6H,H) -> LayerNorm -> LeakyReLU -> Linear(H,HH)
    he = jnp.dot(ent, w1e_ref[...], preferred_element_type=jnp.float32) + b1e_ref[...]
    he = _layernorm(he, ge_ref[...], be_ref[...])
    he = jnp.where(he > 0, he, LEAKY_SLOPE * he)
    xe = jnp.dot(he.astype(cdt), w2e_ref[...], preferred_element_type=jnp.float32) + b2e_ref[...]

    # linear(cat([x_pron, x_ent])) -> GELU -> (dropout=id) -> classifier
    # wl is pre-split into its pronoun / entity halves in the wrapper.
    x = (jnp.dot(xp.astype(cdt), wlp_ref[...], preferred_element_type=jnp.float32)
         + jnp.dot(xe.astype(cdt), wle_ref[...], preferred_element_type=jnp.float32)
         + bl_ref[...])
    x = _gelu_exact(x)
    out_ref[...] = (jnp.dot(x.astype(cdt), wc_ref[...], preferred_element_type=jnp.float32)
                    + bc_ref[...])


def entity_resolution_head(bert_outputs, offsets, params, *,
                           compute_dtype=jnp.float32, batch_tile=128):
    B, S, H = bert_outputs.shape
    (w1p, b1p, gp, bp, w2p, b2p,
     w1e, b1e, ge, be, w2e, b2e,
     wl, bl, wc, bc) = params
    hh = w2p.shape[-1]
    num_out = wc.shape[-1]

    # ---- Phase 1: gather span features (one MXU selector matmul per row) ----
    gathered = pl.pallas_call(
        _gather_kernel,
        out_shape=jax.ShapeDtypeStruct((B, 8, H), jnp.float32),
        grid_spec=pltpu.PrefetchScalarGridSpec(
            num_scalar_prefetch=1,                       # offsets land in SMEM
            grid=(B,),
            in_specs=[pl.BlockSpec((None, S, H), lambda b, off: (b, 0, 0))],
            out_specs=pl.BlockSpec((None, 8, H), lambda b, off: (b, 0, 0)),
        ),
        compiler_params=pltpu.CompilerParams(
            dimension_semantics=("parallel",),           # rows independent
            vmem_limit_bytes=VMEM_LIMIT),
    )(offsets, bert_outputs)

    # Wrapper-side layout plumbing (no compute): pronoun rows + contiguous
    # (B, 6H) entity slab so the entity FFNN is a single K=6H matmul.
    pron = gathered[:, 6, :]                             # (B, H)
    ent = gathered[:, 0:6, :].reshape(B, 6 * H)          # (B, 6H)

    # ---- batch tiling / padding ----
    TB = max(8, _round_up(min(batch_tile, B), 8))
    B_pad = _round_up(B, TB)
    if B_pad != B:
        pad = B_pad - B
        pron = jnp.pad(pron, ((0, pad), (0, 0)))
        ent = jnp.pad(ent, ((0, pad), (0, 0)))

    # ---- weights: optional bf16 matmul inputs, f32 accumulation in-kernel.
    # `linear`'s weight is pre-split so there is no in-kernel tile-crossing slice.
    cdt = compute_dtype
    weight_args = (
        w1p.astype(cdt), b1p, gp, bp, w2p.astype(cdt), b2p,
        w1e.astype(cdt), b1e, ge, be, w2e.astype(cdt), b2e,
        wl[:hh].astype(cdt), wl[hh:].astype(cdt), bl,
        wc.astype(cdt), bc,
    )

    def _full_spec(arr):
        nd = arr.ndim
        return pl.BlockSpec(arr.shape, lambda *_a, _nd=nd: (0,) * _nd)

    in_specs = ([pl.BlockSpec((TB, H), lambda i: (i, 0)),
                 pl.BlockSpec((TB, 6 * H), lambda i: (i, 0))]
                + [_full_spec(a) for a in weight_args])
    out_spec = pl.BlockSpec((TB, num_out), lambda i: (i, 0))

    out = pl.pallas_call(
        _mlp_kernel,
        out_shape=jax.ShapeDtypeStruct((B_pad, num_out), jnp.float32),
        grid_spec=pltpu.PrefetchScalarGridSpec(
            num_scalar_prefetch=0,
            grid=(B_pad // TB,),
            in_specs=in_specs,
            out_specs=out_spec,
        ),
        compiler_params=pltpu.CompilerParams(
            dimension_semantics=("parallel",),           # batch tiles independent
            vmem_limit_bytes=VMEM_LIMIT),
    )(pron, ent, *weight_args)
    return out[:B]


# ---------------------------------------------------------------------------
# Deterministic parameter init (weights stored as (in, out), i.e. W.T of the
# PyTorch nn.Linear weight; biases / LN params stored as (1, N)).
# ---------------------------------------------------------------------------
def init_params(key, H, head_hidden, linear_hidden, num_out):
    ks = jax.random.split(key, 6)

    def lin(k, fan_in, fan_out):
        kw, kb = jax.random.split(k)
        w = 0.05 * jax.random.normal(kw, (fan_in, fan_out), jnp.float32)
        b = 0.05 * jax.random.normal(kb, (1, fan_out), jnp.float32)
        return w, b

    w1p, b1p = lin(ks[0], H, H)
    gp = jnp.ones((1, H), jnp.float32)
    bp = jnp.zeros((1, H), jnp.float32)
    w2p, b2p = lin(ks[1], H, head_hidden)

    w1e, b1e = lin(ks[2], 6 * H, H)
    ge = jnp.ones((1, H), jnp.float32)
    be = jnp.zeros((1, H), jnp.float32)
    w2e, b2e = lin(ks[3], H, head_hidden)

    wl, bl = lin(ks[4], 2 * head_hidden, linear_hidden)
    wc, bc = lin(ks[5], linear_hidden, num_out)
    return (w1p, b1p, gp, bp, w2p, b2p,
            w1e, b1e, ge, be, w2e, b2e,
            wl, bl, wc, bc)


# Pure-JAX reference that mirrors the PyTorch forward exactly.
def reference_forward(bert_outputs, offsets, params):
    (w1p, b1p, gp, bp, w2p, b2p,
     w1e, b1e, ge, be, w2e, b2e,
     wl, bl, wc, bc) = params
    off_np = jax.device_get(offsets)
    outs = []
    for i in range(bert_outputs.shape[0]):
        emb = bert_outputs[i]
        sa, ea, sb, eb, pr = [int(v) for v in off_np[i]]
        emb_a = jnp.concatenate([emb[sa], emb[ea - 1], emb[sa:ea].mean(0)], -1)
        emb_b = jnp.concatenate([emb[sb], emb[eb - 1], emb[sb:eb].mean(0)], -1)
        ent = jnp.concatenate([emb_a, emb_b], -1)[None, :]
        pron = emb[pr][None, :]

        def ln(x, g, bt):
            mu = x.mean(-1, keepdims=True)
            var = ((x - mu) ** 2).mean(-1, keepdims=True)
            return (x - mu) / jnp.sqrt(var + LN_EPS) * g + bt

        hp = pron @ w1p + b1p
        hp = ln(hp, gp, bp)
        hp = jnp.where(hp > 0, hp, LEAKY_SLOPE * hp)
        xp = hp @ w2p + b2p

        he = ent @ w1e + b1e
        he = ln(he, ge, be)
        he = jnp.where(he > 0, he, LEAKY_SLOPE * he)
        xe = he @ w2e + b2e

        x = jnp.concatenate([xp, xe], -1) @ wl + bl
        x = jax.nn.gelu(x, approximate=False)
        outs.append(x @ wc + bc)
    return jnp.concatenate(outs, 0)


if __name__ == "__main__":
    B, S, H = 2, 8, 32            # batch, sequence, bert_hidden_size
    HEAD_HIDDEN = 16              # args.head_hidden_size
    LINEAR_HIDDEN = 24            # args.linear_hidden_size
    NUM_OUTPUT = 3                # args.num_output (A / B / neither)

    key = jax.random.PRNGKey(0)
    k_emb, k_par = jax.random.split(key)
    bert_outputs = jax.random.normal(k_emb, (B, S, H), jnp.float32)
    # [start_A, end_A, start_B, end_B, pron_off] per batch element.
    offsets = jnp.array([[1, 3, 4, 6, 7],
                         [0, 2, 3, 5, 6]], dtype=jnp.int32)
    params = init_params(k_par, H, HEAD_HIDDEN, LINEAR_HIDDEN, NUM_OUTPUT)

    ref = reference_forward(bert_outputs, offsets, params)

    # f32 matmul path (bit-faithful to the PyTorch f32 forward).
    out = entity_resolution_head(bert_outputs, offsets, params)
    out = jax.block_until_ready(out)
    assert out.shape == (B, NUM_OUTPUT)
    assert jnp.allclose(out, ref, atol=1e-3, rtol=1e-3), (out, ref)

    # bf16 matmul inputs (native MXU format), f32 accumulation.
    out_bf16 = entity_resolution_head(bert_outputs, offsets, params,
                                      compute_dtype=jnp.bfloat16)
    out_bf16 = jax.block_until_ready(out_bf16)
    assert out_bf16.shape == (B, NUM_OUTPUT)
    assert jnp.allclose(out_bf16, ref, atol=5e-2, rtol=5e-2), (out_bf16, ref)

    print("KERNEL_OK")
</pallas_src>

<mosaic_0001>
module attributes {stable_mosaic.version = 11 : i64} {
  func.func @_gather_kernel(%arg0: i32, %arg1: memref<2x5xi32, #tpu.memory_space<smem>>, %arg2: memref<1x8x32xf32, #tpu.memory_space<vmem>>, %arg3: memref<1x8x32xf32, #tpu.memory_space<vmem>>) attributes {dimension_semantics = [#tpu.dimension_semantics<parallel>], iteration_bounds = array<i64: 2>, scalar_prefetch = 1 : i64, scratch_operands = 0 : i64, tpu.core_type = #tpu.core_type<tc>, window_params = [{transform_indices = @transform_0, window_bounds = array<i64: 1, 8, 32>}, {transform_indices = @transform_1, window_bounds = array<i64: 1, 8, 32>}]} {
    %0 = arith.index_cast %arg0 : i32 to index
    %c0 = arith.constant 0 : index
    %1 = memref.load %arg1[%0, %c0] : memref<2x5xi32, #tpu.memory_space<smem>>
    %2 = arith.index_cast %arg0 : i32 to index
    %c1 = arith.constant 1 : index
    %3 = memref.load %arg1[%2, %c1] : memref<2x5xi32, #tpu.memory_space<smem>>
    %4 = arith.index_cast %arg0 : i32 to index
    %c2 = arith.constant 2 : index
    %5 = memref.load %arg1[%4, %c2] : memref<2x5xi32, #tpu.memory_space<smem>>
    %6 = arith.index_cast %arg0 : i32 to index
    %c3 = arith.constant 3 : index
    %7 = memref.load %arg1[%6, %c3] : memref<2x5xi32, #tpu.memory_space<smem>>
    %8 = arith.index_cast %arg0 : i32 to index
    %c4 = arith.constant 4 : index
    %9 = memref.load %arg1[%8, %c4] : memref<2x5xi32, #tpu.memory_space<smem>>
    %10 = tpu.iota {dimensions = array<i32: 0>} : vector<8x8xi32>
    %11 = tpu.iota {dimensions = array<i32: 1>} : vector<8x8xi32>
    %12 = arith.subi %3, %1 : i32
    %13 = arith.sitofp %12 : i32 to f32
    %cst = arith.constant 1.000000e+00 : f32
    %14 = arith.divf %cst, %13 : f32
    %15 = arith.subi %7, %5 : i32
    %16 = arith.sitofp %15 : i32 to f32
    %cst_0 = arith.constant 1.000000e+00 : f32
    %17 = arith.divf %cst_0, %16 : f32
    %cst_1 = arith.constant 0.000000e+00 : f32
    %18 = vector.broadcast %cst_1 : f32 to vector<8x8xf32>
    %c0_i32 = arith.constant 0 : i32
    %19 = vector.broadcast %c0_i32 : i32 to vector<8x8xi32>
    %20 = arith.cmpi eq, %10, %19 : vector<8x8xi32>
    %21 = vector.broadcast %1 : i32 to vector<8x8xi32>
    %22 = arith.cmpi eq, %11, %21 : vector<8x8xi32>
    %23 = arith.andi %20, %22 : vector<8x8xi1>
    %cst_2 = arith.constant 1.000000e+00 : f32
    %24 = vector.broadcast %cst_2 : f32 to vector<8x8xf32>
    %25 = arith.select %23, %24, %18 : vector<8x8xi1>, vector<8x8xf32>
    %c1_i32 = arith.constant 1 : i32
    %26 = vector.broadcast %c1_i32 : i32 to vector<8x8xi32>
    %27 = arith.cmpi eq, %10, %26 : vector<8x8xi32>
    %c1_i32_3 = arith.constant 1 : i32
    %28 = arith.subi %3, %c1_i32_3 : i32
    %29 = vector.broadcast %28 : i32 to vector<8x8xi32>
    %30 = arith.cmpi eq, %11, %29 : vector<8x8xi32>
    %31 = arith.andi %27, %30 : vector<8x8xi1>
    %cst_4 = arith.constant 1.000000e+00 : f32
    %32 = vector.broadcast %cst_4 : f32 to vector<8x8xf32>
    %33 = arith.select %31, %32, %25 : vector<8x8xi1>, vector<8x8xf32>
    %c2_i32 = arith.constant 2 : i32
    %34 = vector.broadcast %c2_i32 : i32 to vector<8x8xi32>
    %35 = arith.cmpi eq, %10, %34 : vector<8x8xi32>
    %36 = vector.broadcast %1 : i32 to vector<8x8xi32>
    %37 = arith.cmpi sge, %11, %36 : vector<8x8xi32>
    %38 = arith.andi %35, %37 : vector<8x8xi1>
    %39 = vector.broadcast %3 : i32 to vector<8x8xi32>
    %40 = arith.cmpi slt, %11, %39 : vector<8x8xi32>
    %41 = arith.andi %38, %40 : vector<8x8xi1>
    %42 = vector.broadcast %14 : f32 to vector<8x8xf32>
    %43 = arith.select %41, %42, %33 : vector<8x8xi1>, vector<8x8xf32>
    %c3_i32 = arith.constant 3 : i32
    %44 = vector.broadcast %c3_i32 : i32 to vector<8x8xi32>
    %45 = arith.cmpi eq, %10, %44 : vector<8x8xi32>
    %46 = vector.broadcast %5 : i32 to vector<8x8xi32>
    %47 = arith.cmpi eq, %11, %46 : vector<8x8xi32>
    %48 = arith.andi %45, %47 : vector<8x8xi1>
    %cst_5 = arith.constant 1.000000e+00 : f32
    %49 = vector.broadcast %cst_5 : f32 to vector<8x8xf32>
    %50 = arith.select %48, %49, %43 : vector<8x8xi1>, vector<8x8xf32>
    %c4_i32 = arith.constant 4 : i32
    %51 = vector.broadcast %c4_i32 : i32 to vector<8x8xi32>
    %52 = arith.cmpi eq, %10, %51 : vector<8x8xi32>
    %c1_i32_6 = arith.constant 1 : i32
    %53 = arith.subi %7, %c1_i32_6 : i32
    %54 = vector.broadcast %53 : i32 to vector<8x8xi32>
    %55 = arith.cmpi eq, %11, %54 : vector<8x8xi32>
    %56 = arith.andi %52, %55 : vector<8x8xi1>
    %cst_7 = arith.constant 1.000000e+00 : f32
    %57 = vector.broadcast %cst_7 : f32 to vector<8x8xf32>
    %58 = arith.select %56, %57, %50 : vector<8x8xi1>, vector<8x8xf32>
    %c5_i32 = arith.constant 5 : i32
    %59 = vector.broadcast %c5_i32 : i32 to vector<8x8xi32>
    %60 = arith.cmpi eq, %10, %59 : vector<8x8xi32>
    %61 = vector.broadcast %5 : i32 to vector<8x8xi32>
    %62 = arith.cmpi sge, %11, %61 : vector<8x8xi32>
    %63 = arith.andi %60, %62 : vector<8x8xi1>
    %64 = vector.broadcast %7 : i32 to vector<8x8xi32>
    %65 = arith.cmpi slt, %11, %64 : vector<8x8xi32>
    %66 = arith.andi %63, %65 : vector<8x8xi1>
    %67 = vector.broadcast %17 : f32 to vector<8x8xf32>
    %68 = arith.select %66, %67, %58 : vector<8x8xi1>, vector<8x8xf32>
    %c6_i32 = arith.constant 6 : i32
    %69 = vector.broadcast %c6_i32 : i32 to vector<8x8xi32>
    %70 = arith.cmpi eq, %10, %69 : vector<8x8xi32>
    %71 = vector.broadcast %9 : i32 to vector<8x8xi32>
    %72 = arith.cmpi eq, %11, %71 : vector<8x8xi32>
    %73 = arith.andi %70, %72 : vector<8x8xi1>
    %cst_8 = arith.constant 1.000000e+00 : f32
    %74 = vector.broadcast %cst_8 : f32 to vector<8x8xf32>
    %75 = arith.select %73, %74, %68 : vector<8x8xi1>, vector<8x8xf32>
    %c0_9 = arith.constant 0 : index
    %c0_10 = arith.constant 0 : index
    %c0_11 = arith.constant 0 : index
    %76 = vector.load %arg2[%c0_9, %c0_10, %c0_11] : memref<1x8x32xf32, #tpu.memory_space<vmem>>, vector<1x8x32xf32>
    %77 = vector.shape_cast %76 : vector<1x8x32xf32> to vector<8x32xf32>
    %cst_12 = arith.constant dense<0.000000e+00> : vector<8x32xf32>
    %78 = tpu.matmul %75, %77, %cst_12 {dimension_numbers = #tpu.dot_dimension_numbers<[1], [0], [0], [1], [0, 0, 1, 1], [], []>} : vector<8x8xf32>, vector<8x32xf32>, vector<8x32xf32> -> vector<8x32xf32>
    %c0_13 = arith.constant 0 : index
    %c0_14 = arith.constant 0 : index
    %c0_15 = arith.constant 0 : index
    %79 = vector.load %arg3[%c0_13, %c0_14, %c0_15] : memref<1x8x32xf32, #tpu.memory_space<vmem>>, vector<1x8x32xf32>
    %80 = vector.shape_cast %79 : vector<1x8x32xf32> to vector<8x32xf32>
    %81 = vector.shape_cast %78 : vector<8x32xf32> to vector<1x8x32xf32>
    tpu.vector_store %arg3[%c0_13, %c0_14, %c0_15], %81 {strides = array<i32>} : memref<1x8x32xf32, #tpu.memory_space<vmem>>, vector<1x8x32xf32>,
    return
  }
  func.func @transform_0(%arg0: i32, %arg1: memref<2x5xi32, #tpu.memory_space<smem>>) -> (i32, i32, i32) {
    %c0_i32 = arith.constant 0 : i32
    %c0_i32_0 = arith.constant 0 : i32
    %c0_i32_1 = arith.constant 0 : i32
    return %arg0, %c0_i32, %c0_i32_0 : i32, i32, i32
  }
  func.func @transform_1(%arg0: i32, %arg1: memref<2x5xi32, #tpu.memory_space<smem>>) -> (i32, i32, i32) {
    %c0_i32 = arith.constant 0 : i32
    %c0_i32_0 = arith.constant 0 : i32
    %c0_i32_1 = arith.constant 0 : i32
    return %arg0, %c0_i32, %c0_i32_0 : i32, i32, i32
  }
}

</mosaic_0001>

<llo_original>
// kernel: tpu_custom_call.1
$region0: #{tpu_custom_call.1}
  #allocation0 [shape = 'u32[]', space=smem, size = 0x4, offset = 0x4, fixed_abs, tag = 'smem constant byte address 0x4 - core index']
  #allocation1 [shape = 'u32[72,128]{1,0:T(1,128)}', space=vmem, size = 0x9000, scoped, tag = 'internal scratch']
  #allocation2 [shape = 's32[1]{0}', space=sflag, size = 0x4, scoped, tag = 'scoped memory for tpu_custom_call.1']
  #allocation3 [shape = 'u8[1024]{0}', space=smem, size = 0x400, scoped, tag = 'prefetched SMEM operand 0']
  %s0 = inlined_call_operand.hbm [shape: s32[2,5], index: 0, kind: input, shape index: {}]
  %s1 = inlined_call_operand.hbm [shape: f32[2,8,32], index: 1, kind: input, shape index: {}]
  %s2 = inlined_call_operand.hbm [shape: f32[2,8,32], index: 2, kind: output, shape index: {}]
  %s3 = sld [smem:[#allocation0]]
  $region41: #{tpu_custom_call.1} parent=0
    _
  %s5 = ssub.s32 1, %s3
  %s6 = scalar_select 0, %s5, %s3
  %s8 = sshll.u32 %s0, 4
  %s9 = int_to_ptr.hbm [resolvable:$true] %s8
  %11 = dma.hbm_to_smem %s9, 32, [#allocation3], [#allocation2]
  %13 = dma.done [#allocation2], 32
  %14 = sfence
  $region1: #{tpu_custom_call.1} parent=0
    #allocation4 [shape = 'u8[8192]{0}', space=vmem, size = 0x2000, scoped, tag = 'input window, operand 1']
    #allocation5 [shape = 's32[2]{0}', space=sflag, size = 0x8, scoped, tag = 'scoped memory for tpu_custom_call.1']
    #allocation6 [shape = 's32[2]{0}', space=sflag, size = 0x8, scoped, tag = 'scoped memory for tpu_custom_call.1']
    #allocation7 [shape = 'u8[8192]{0}', space=vmem, size = 0x2000, scoped, tag = 'output window, operand 0']
    %15 = vsyncpa [#allocation5], 0
    %s16 = scalar_lea.sflag [#allocation5], 1
    %17 = vsyncpa %s16, 0
    %18 = vsyncpa [#allocation6], 0
    %s19 = scalar_lea.sflag [#allocation6], 1
    %20 = vsyncpa %s19, 0
    loop: start=0, step=1, limit=4
    $region2: #{tpu_custom_call.1} parent=1 // loop_pre_header
      _
    $region3: #{tpu_custom_call.1} parent=1 // loop_header
      %s22 = sphi 0, %s26
      %p23 = scmp.ge.s32.totalorder %s22, 4
      %s32 = sphi 0, %s34
      %s35 = sphi 0, %s32
      %s36 = sphi 0, %s35
      %s52 = sphi 0, %s36
      %s58 = sphi 0, %s60
      %s61 = sphi 0, %s58
      %s62 = sphi 0, %s61
      %s78 = sphi 0, %s62
    $region4: #{tpu_custom_call.1} parent=1 // loop_header_branch
      %25 = sbr.rel (%p23) target = $region8
    $region5: #{tpu_custom_call.1} parent=1 // loop_body
      %s27 = ssub.s32 %s22, 1
      %s28 = ssub.s32 %s22, 2
      %s29 = sadd.s32 %s22, 1
      %s30 = ssub.s32 %s22, %s29
      %p31 = scmp.eq.s32.totalorder %s30, 0
      %s33 = sadd.s32 %s32, 1
      %s34 = scalar_select %p31, %s32, %s33
      %p37 = pneg %p31
      %p38 = scmp.eq.s32.totalorder %s22, 1
      %p39 = por %p37, %p38
      %p40 = scmp.ne.s32.totalorder %s32, %s35
      %p41 = scmp.eq.s32.totalorder %s22, 0
      %p42 = por %p40, %p41
      %p43 = scmp.ne.s32.totalorder %s32, %s35
      %p44 = scmp.eq.s32.totalorder %s27, 1
      %p45 = por %p43, %p44
      %p46 = scmp.ne.s32.totalorder %s35, %s36
      %p47 = scmp.eq.s32.totalorder %s27, 0
      %p48 = por %p46, %p47
      %p49 = scmp.ne.s32.totalorder %s35, %s36
      %p50 = scmp.eq.s32.totalorder %s28, 1
      %p51 = por %p49, %p50
      %p53 = scmp.ne.s32.totalorder %s36, %s52
      %p54 = scmp.eq.s32.totalorder %s28, 0
      %p55 = por %p53, %p54
      %s56 = ssub.s32 %s22, %s29
      %p57 = scmp.eq.s32.totalorder %s56, 0
      %s59 = sadd.s32 %s58, 1
      %s60 = scalar_select %p57, %s58, %s59
      %p63 = pneg %p57
      %p64 = scmp.eq.s32.totalorder %s22, 1
      %p65 = por %p63, %p64
      %p66 = scmp.ne.s32.totalorder %s58, %s61
      %p67 = scmp.eq.s32.totalorder %s22, 0
      %p68 = por %p66, %p67
      %p69 = scmp.ne.s32.totalorder %s58, %s61
      %p70 = scmp.eq.s32.totalorder %s27, 1
      %p71 = por %p69, %p70
      %p72 = scmp.ne.s32.totalorder %s61, %s62
      %p73 = scmp.eq.s32.totalorder %s27, 0
      %p74 = por %p72, %p73
      %p75 = scmp.ne.s32.totalorder %s61, %s62
      %p76 = scmp.eq.s32.totalorder %s28, 1
      %p77 = por %p75, %p76
      %p79 = scmp.ne.s32.totalorder %s62, %s78
      %p80 = scmp.eq.s32.totalorder %s28, 0
      %p81 = por %p79, %p80
      %p82 = scmp.le.s32.totalorder 1, %s22
      %p83 = scmp.lt.s32.totalorder %s22, 3
      %p84 = pnand %p82, %p83
      %p85 = pneg %p84
      // Predicated region
      $region9: #{tpu_custom_call.1} parent=5 // pred_check
        _
      $region10: #{tpu_custom_call.1} parent=5 // pred_check_branch
        %87 = sbr.rel (%p84) target = $region12
      $region11: #{tpu_custom_call.1} parent=5 // pred_region
        %s88 = ssub.s32 %s22, 1
      $region12: #{tpu_custom_call.1} parent=5 // pred_fallthru
        _
      %p89 = scmp.lt.s32.totalorder %s22, 2
      // Predicated region
      $region13: #{tpu_custom_call.1} parent=5 // pred_check
        %p90 = pneg %p89
      $region14: #{tpu_custom_call.1} parent=5 // pred_check_branch
        %92 = sbr.rel (%p90) target = $region16
      $region15: #{tpu_custom_call.1} parent=5 // pred_region
        // Predicated region
        $region17: #{tpu_custom_call.1} parent=15 // pred_check
          %p93 = pneg %p42
        $region18: #{tpu_custom_call.1} parent=15 // pred_check_branch
          %95 = sbr.rel (%p93) target = $region20
        $region19: #{tpu_custom_call.1} parent=15 // pred_region
          %s96 = sand.u32 %s32, 1
          %s97 = scalar_lea.sflag [#allocation5], %s96
          %s98 = sand.u32 %s32, 1
          %s99 = smul.addr %s98, 8
          %s100 = scalar_lea.vmem [#allocation4], %s99
          %102 = vsyncadd %s97, 0
          %s103 = smul.addr %s22, 8
          %s104 = scalar_lea.hbm %s1, %s103
          %s106 = sshll.u32 %s104, 4
          %s107 = int_to_ptr.hbm [resolvable:$true] %s106
          %s108 = sshll.u32 %s100, 4
          %s109 = int_to_ptr.vmem [resolvable:$true] %s108
          %111 = dma.hbm_to_vmem [thread:$0]  %s107, 128, %s109, %s97
        $region20: #{tpu_custom_call.1} parent=15 // pred_fallthru
          _
      $region16: #{tpu_custom_call.1} parent=5 // pred_fallthru
        _
      %p112 = scmp.le.s32.totalorder 1, %s22
      %p113 = scmp.lt.s32.totalorder %s22, 3
      %p114 = pnand %p112, %p113
      %p115 = pneg %p114
      // Predicated region
      $region21: #{tpu_custom_call.1} parent=5 // pred_check
        _
      $region22: #{tpu_custom_call.1} parent=5 // pred_check_branch
        %117 = sbr.rel (%p114) target = $region24
      $region23: #{tpu_custom_call.1} parent=5 // pred_region
        %s118 = ssub.s32 %s22, 1
        %s119 = sand.u32 %s35, 1
        %s120 = scalar_lea.sflag [#allocation5], %s119
        %s121 = sand.u32 %s35, 1
        %s122 = smul.addr %s121, 8
        %s123 = scalar_lea.vmem [#allocation4], %s122
        // Predicated region
        $region25: #{tpu_custom_call.1} parent=23 // pred_check
          %p124 = pneg %p48
        $region26: #{tpu_custom_call.1} parent=23 // pred_check_branch
          %126 = sbr.rel (%p124) target = $region28
        $region27: #{tpu_custom_call.1} parent=23 // pred_region
          %128 = dma.done %s120, 128
        $region28: #{tpu_custom_call.1} parent=23 // pred_fallthru
          _
        %s129 = sand.u32 %s35, 1
        %s130 = scalar_lea.sflag [#allocation5], %s129
        %s131 = sand.u32 %s35, 1
        %s132 = smul.addr %s131, 8
        %s133 = scalar_lea.vmem [#allocation4], %s132
        %p134 = pneg %p48
        %p135 = pneg %p45
        %p136 = pneg %p74
        %p137 = pneg %p71
        %s138 = sand.u32 %s61, 1
        %s139 = scalar_lea.sflag [#allocation6], %s138
        %s140 = sand.u32 %s61, 1
        %s141 = smul.addr %s140, 8
        %s142 = scalar_lea.vmem [#allocation7], %s141
        %s143 = smul.u32 %s27, 128
        %s144 = sld [smem:[#allocation3 + %s143]]
        %s145 = sadd.s32 %s143, 1
        %s146 = sld [smem:[#allocation3 + %s145]]
        %s147 = sadd.s32 %s143, 2
        %s148 = sld [smem:[#allocation3 + %s147]]
        %s149 = sadd.s32 %s143, 3
        %s150 = sld [smem:[#allocation3 + %s149]]
        %s151 = sadd.s32 %s143, 4
        %s152 = sld [smem:[#allocation3 + %s151]]
        %v153 = vlaneseq
        %v154 = vshrl.u32 %v153, 7
        %v155 = vlaneseq
        %v156 = vand.u32 %v155, 127
        %s157 = ssub.s32 %s146, %s144
        %s158 = scvt.s32.f32 %s157
        %v159 = vstv %s158
        %v160 = vrcp.pop %v159
        %v161 = vmul.f32 %v159, %v160
        %v162 = vsub.f32 1.0, %v161
        %v163 = vmul.f32 %v160, %v162
        %v164 = vadd.f32 %v160, %v163
        %vm165 = vweird.f32 %v159
        %vm166 = vweird.f32 %v160
        %vm167 = vmor %vm165, %vm166
        %v168 = vsel %vm167, %v160, %v164
        %v169 = vand.u32 2147483647, %v159
        %vm170 = vcmp.eq.f32.partialorder %v169, 8.507059e+37
        %v171 = vand.u32 %v159, 2147483648
        %v172 = vor.u32 1.1754944e-38, %v171
        %v173 = vsel %vm170, %v172, %v168
        %s174 = vtos %v173
        %s175 = ssub.s32 %s150, %s148
        %s176 = scvt.s32.f32 %s175
        %v177 = vstv %s176
        %v178 = vrcp.pop %v177
        %v179 = vmul.f32 %v177, %v178
        %v180 = vsub.f32 1.0, %v179
        %v181 = vmul.f32 %v178, %v180
        %v182 = vadd.f32 %v178, %v181
        %vm183 = vweird.f32 %v177
        %vm184 = vweird.f32 %v178
        %vm185 = vmor %vm183, %vm184
        %v186 = vsel %vm185, %v178, %v182
        %v187 = vand.u32 2147483647, %v177
        %vm188 = vcmp.eq.f32.partialorder %v187, 8.507059e+37
        %v189 = vand.u32 %v177, 2147483648
        %v190 = vor.u32 1.1754944e-38, %v189
        %v191 = vsel %vm188, %v190, %v186
        %s192 = vtos %v191
        %vm193 = vcmp.eq.s32.totalorder %v154, 0
        %v194 = vstv %s144
        %vm195 = vcmp.eq.s32.totalorder %v156, %v194
        %vm196 = vmand %vm193, %vm195
        %v197 = vsel %vm196, 1.0, 0.0
        %vm198 = vcmp.eq.s32.totalorder %v154, 1
        %s199 = ssub.s32 %s146, 1
        %v200 = vstv %s199
        %vm201 = vcmp.eq.s32.totalorder %v156, %v200
        %vm202 = vmand %vm198, %vm201
        %v203 = vsel %vm202, 1.0, %v197
        %vm204 = vcmp.eq.s32.totalorder %v154, 2
        %vm205 = vcmp.ge.s32.totalorder %v156, %v194
        %vm206 = vmand %vm204, %vm205
        %v207 = vstv %s146
        %vm208 = vcmp.lt.s32.totalorder %v156, %v207
        %vm209 = vmand %vm206, %vm208
        %v210 = vstv %s174
        %v211 = vsel %vm209, %v210, %v203
        %vm212 = vcmp.eq.s32.totalorder %v154, 3
        %v213 = vstv %s148
        %vm214 = vcmp.eq.s32.totalorder %v156, %v213
        %vm215 = vmand %vm212, %vm214
        %v216 = vsel %vm215, 1.0, %v211
        %vm217 = vcmp.eq.s32.totalorder %v154, 4
        %s218 = ssub.s32 %s150, 1
        %v219 = vstv %s218
        %vm220 = vcmp.eq.s32.totalorder %v156, %v219
        %vm221 = vmand %vm217, %vm220
        %v222 = vsel %vm221, 1.0, %v216
        %vm223 = vcmp.eq.s32.totalorder %v154, 5
        %vm224 = vcmp.ge.s32.totalorder %v156, %v213
        %vm225 = vmand %vm223, %vm224
        %v226 = vstv %s150
        %vm227 = vcmp.lt.s32.totalorder %v156, %v226
        %vm228 = vmand %vm225, %vm227
        %v229 = vstv %s192
        %v230 = vsel %vm228, %v229, %v222
        %vm231 = vcmp.eq.s32.totalorder %v154, 6
        %v232 = vstv %s152
        %vm233 = vcmp.eq.s32.totalorder %v156, %v232
        %vm234 = vmand %vm231, %vm233
        %v235 = vsel %vm234, 1.0, %v230
        %v236 = vld [vmem:[%s123] sm:$0xff]
        %vm237 = vcmask 64512
        %v239 = vsel %vm237, %v235, 0
        %241 = vmatpush.msra.mxu0 0.0
        %242 = vmatpush.msra.mxu0 0.0
        %243 = vmatpush.msra.mxu0 0.0
        %244 = vmatpush.msra.mxu0 0.0
        %245 = vmatpush.msra.mxu0 0.0
        %246 = vmatpush.msra.mxu0 0.0
        %247 = vmatpush.msra.mxu0 0.0
        %248 = vmatpush.msra.mxu0 0.0
        %249 = vmatpush.msra.mxu0 0.0
        %250 = vmatpush.msra.mxu0 0.0
        %251 = vmatpush.msra.mxu0 0.0
        %252 = vmatpush.msra.mxu0 0.0
        %253 = vmatpush.msra.mxu0 0.0
        %254 = vmatpush.msra.mxu0 0.0
        %255 = vmatpush.msra.mxu0 0.0
        %256 = vmatpush.msra.mxu0 %v236
        %257 = vmatmul.f32.gmra.mxu0 %v239
        %v258 = vpop.f32.mrf.mxu0
        %v259 = vadd.f32 0.0, %v258
        %260 = vdwg.mxu0
        %vm261 = vcmask 261120
        %262 = vst.msk [vmem:[%s142] sm:$0xff] %vm261, %v259
        %s263 = sand.u32 %s61, 1
        %s264 = scalar_lea.sflag [#allocation6], %s263
        %s265 = sand.u32 %s61, 1
        %s266 = smul.addr %s265, 8
        %s267 = scalar_lea.vmem [#allocation7], %s266
        // Predicated region
        $region29: #{tpu_custom_call.1} parent=23 // pred_check
          %p268 = pneg %p71
        $region30: #{tpu_custom_call.1} parent=23 // pred_check_branch
          %270 = sbr.rel (%p268) target = $region32
        $region31: #{tpu_custom_call.1} parent=23 // pred_region
          %272 = vsyncadd %s264, 0
          %s273 = smul.addr %s27, 8
          %s274 = scalar_lea.hbm %s2, %s273
          %s276 = sshll.u32 %s267, 4
          %s277 = int_to_ptr.vmem [resolvable:$true] %s276
          %s278 = sshll.u32 %s274, 4
          %s279 = int_to_ptr.hbm [resolvable:$true] %s278
          %281 = dma.vmem_to_hbm [thread:$0]  %s277, 128, %s279, %s264
        $region32: #{tpu_custom_call.1} parent=23 // pred_fallthru
          _
      $region24: #{tpu_custom_call.1} parent=5 // pred_fallthru
        _
      %p282 = scmp.le.s32.totalorder 2, %s22
      // Predicated region
      $region33: #{tpu_custom_call.1} parent=5 // pred_check
        %p283 = pneg %p282
      $region34: #{tpu_custom_call.1} parent=5 // pred_check_branch
        %285 = sbr.rel (%p283) target = $region36
      $region35: #{tpu_custom_call.1} parent=5 // pred_region
        %s286 = ssub.s32 %s22, 2
        // Predicated region
        $region37: #{tpu_custom_call.1} parent=35 // pred_check
          %p287 = pneg %p77
        $region38: #{tpu_custom_call.1} parent=35 // pred_check_branch
          %289 = sbr.rel (%p287) target = $region40
        $region39: #{tpu_custom_call.1} parent=35 // pred_region
          %s290 = sand.u32 %s62, 1
          %s291 = scalar_lea.sflag [#allocation6], %s290
          %s292 = sand.u32 %s62, 1
          %s293 = smul.addr %s292, 8
          %s294 = scalar_lea.vmem [#allocation7], %s293
          %296 = dma.done %s291, 128
        $region40: #{tpu_custom_call.1} parent=35 // pred_fallthru
          _
      $region36: #{tpu_custom_call.1} parent=5 // pred_fallthru
        _
    $region6: #{tpu_custom_call.1} parent=1 // loop_footer
      %s26 = sadd.s32 1, %s22
    $region7: #{tpu_custom_call.1} parent=1 // loop_footer_branch
      %21 = sbr.rel target = $region3
    $region8: #{tpu_custom_call.1} parent=1 // loop_exit
      _
    %297 = vsyncpa [#allocation5], 1
    %s298 = scalar_lea.sflag [#allocation5], 1
    %299 = vsyncpa %s298, 1
    %300 = vsyncpa [#allocation6], 1
    %s301 = scalar_lea.sflag [#allocation6], 1
    %302 = vsyncpa %s301, 1

</llo_original>
